<compile_context>
chip_gen: v7x
topology: tpu7x:2x2x1
jax: 0.10.0
libtpu: 0.0.40
codegen_flags: <defaults>
</compile_context>

<pallas_src>
import jax
import jax.numpy as jnp
from jax.experimental import pallas as pl
from jax.experimental.pallas import tpu as pltpu


def _pick_tile_b(B: int, T: int) -> int:
    """Pick a batch tile so each input block is ~4 MiB (f32-equivalent)."""
    target_block_bytes = 4 << 20          # per input block per buffer
    rows = target_block_bytes // max(T * 4, 1)
    rows = max(8, (rows // 8) * 8)        # sublane-aligned
    if B <= rows:
        return B                          # one full-batch block (full-dim, no (8,) constraint)
    return rows


def _make_mda_kernel(B: int, tile_b: int, inv_total: float, need_row_mask: bool):
    def kernel(pred_ref, true_ref, out_ref, acc_ref):
        i = pl.program_id(0)

        @pl.when(i == 0)
        def _init():
            acc_ref[...] = jnp.zeros_like(acc_ref)

        # Cast in-kernel (inputs arrive in their native dtype; on v5e the VPU
        # has no bf16 path so the subtract must be f32 anyway).
        p = pred_ref[...].astype(jnp.float32)   # (tile_b, T)
        t = true_ref[...].astype(jnp.float32)

        # Forward differences along the time (lane) axis.
        pd = p[:, 1:] - p[:, :-1]               # (tile_b, T-1)
        td = t[:, 1:] - t[:, :-1]
        correct = (pd * td) > 0

        if need_row_mask:
            # Mask padded rows of the last (partial) batch tile.
            rows = i * tile_b + jax.lax.broadcasted_iota(jnp.int32, correct.shape, 0)
            correct = jnp.logical_and(correct, rows < B)

        # Pure VPU add per step; the scalar reduce happens once at the end.
        acc_ref[...] += correct.astype(jnp.float32)

        @pl.when(i == pl.num_programs(0) - 1)
        def _finalize():
            out_ref[0, 0] = jnp.sum(acc_ref[...]) * inv_total

    return kernel


def mda(pred: jnp.ndarray, true: jnp.ndarray, *, tile_b: int | None = None) -> jnp.ndarray:
    """Mean Directional Accuracy.  pred/true: (B, T) -> scalar float32."""
    assert pred.shape == true.shape, "pred and true must have the same shape"
    B, T = pred.shape

    if T < 2:
        # Same semantics as the PyTorch module's early return.
        print(f"[Warning] Not enough steps to compute MDA. pred.shape: {pred.shape}")
        return jnp.float32(0.0)

    if tile_b is None:
        tile_b = _pick_tile_b(B, T)
    tile_b = min(int(tile_b), B)
    if tile_b < B and tile_b % 8 != 0:
        tile_b = max(8, (tile_b // 8) * 8)     # keep sublane alignment for partial tiles

    num_tiles = pl.cdiv(B, tile_b)
    need_row_mask = (B % tile_b) != 0
    inv_total = 1.0 / float(B * (T - 1))       # Python float -> baked constant, not a tracer

    kernel = _make_mda_kernel(B, tile_b, inv_total, need_row_mask)

    out = pl.pallas_call(
        kernel,
        out_shape=jax.ShapeDtypeStruct((1, 1), jnp.float32),
        grid_spec=pltpu.PrefetchScalarGridSpec(
            num_scalar_prefetch=0,
            grid=(num_tiles,),
            in_specs=[
                pl.BlockSpec((tile_b, T), lambda i: (i, 0)),
                pl.BlockSpec((tile_b, T), lambda i: (i, 0)),
            ],
            out_specs=pl.BlockSpec(memory_space=pltpu.MemorySpace.SMEM),
            scratch_shapes=[pltpu.VMEM((tile_b, T - 1), jnp.float32)],
        ),
        compiler_params=pltpu.CompilerParams(
            dimension_semantics=("arbitrary",),   # accumulator carried across batch tiles
        ),
    )(pred, true)
    return out[0, 0]


def _ref_mda(pred, true):
    p = pred.astype(jnp.float32)
    t = true.astype(jnp.float32)
    pd = p[:, 1:] - p[:, :-1]
    td = t[:, 1:] - t[:, :-1]
    return jnp.mean((pd * td > 0).astype(jnp.float32))


if __name__ == "__main__":
    key = jax.random.PRNGKey(0)
    k1, k2 = jax.random.split(key)

    # 1) float32, single-tile path.
    B, T = 16, 128
    pred = jax.random.normal(k1, (B, T), dtype=jnp.float32)
    true = jax.random.normal(k2, (B, T), dtype=jnp.float32)
    res = jax.block_until_ready(mda(pred, true))
    ref = _ref_mda(pred, true)
    assert jnp.allclose(res, ref, atol=1e-6), (res, ref)

    # 2) non-multiple batch + forced small tile: multi-step grid + row masking.
    B2, T2 = 12, 96
    p2 = jax.random.normal(jax.random.PRNGKey(1), (B2, T2), dtype=jnp.float32)
    t2 = jax.random.normal(jax.random.PRNGKey(2), (B2, T2), dtype=jnp.float32)
    res2 = jax.block_until_ready(mda(p2, t2, tile_b=8))
    ref2 = _ref_mda(p2, t2)
    assert jnp.allclose(res2, ref2, atol=1e-6), (res2, ref2)

    # 3) bf16 inputs passed through in native dtype (cast happens in-kernel).
    p3 = jax.random.normal(jax.random.PRNGKey(3), (B, T), dtype=jnp.bfloat16)
    t3 = jax.random.normal(jax.random.PRNGKey(4), (B, T), dtype=jnp.bfloat16)
    res3 = jax.block_until_ready(mda(p3, t3))
    ref3 = _ref_mda(p3, t3)
    assert jnp.allclose(res3, ref3, atol=1e-6), (res3, ref3)

    print("KERNEL_OK")
</pallas_src>

<mosaic_0001>
module attributes {stable_mosaic.version = 11 : i64} {
  func.func @kernel(%arg0: i32, %arg1: memref<16x128xf32, #tpu.memory_space<vmem>>, %arg2: memref<16x128xf32, #tpu.memory_space<vmem>>, %arg3: memref<1x1xf32, #tpu.memory_space<smem>>, %arg4: memref<16x127xf32, #tpu.memory_space<vmem>>) attributes {dimension_semantics = [#tpu.dimension_semantics<arbitrary>], iteration_bounds = array<i64: 1>, scalar_prefetch = 0 : i64, scratch_operands = 1 : i64, tpu.core_type = #tpu.core_type<tc>, window_params = [{transform_indices = @transform_0, window_bounds = array<i64: 16, 128>}, {transform_indices = @transform_1, window_bounds = array<i64: 16, 128>}, {transform_indices = @transform_2, window_bounds = array<i64: 1, 1>}]} {
    %c0_i32 = arith.constant 0 : i32
    %0 = arith.cmpi eq, %arg0, %c0_i32 : i32
    %1 = arith.extui %0 : i1 to i32
    %c0_i32_0 = arith.constant 0 : i32
    %2 = arith.cmpi ne, %1, %c0_i32_0 : i32
    scf.if %2 {
      %cst_10 = arith.constant 0.000000e+00 : f32
      %22 = vector.broadcast %cst_10 : f32 to vector<16x127xf32>
      %c0_11 = arith.constant 0 : index
      %c0_12 = arith.constant 0 : index
      %23 = vector.load %arg4[%c0_11, %c0_12] : memref<16x127xf32, #tpu.memory_space<vmem>>, vector<16x127xf32>
      tpu.vector_store %arg4[%c0_11, %c0_12], %22 {strides = array<i32>} : memref<16x127xf32, #tpu.memory_space<vmem>>, vector<16x127xf32>,
    } else {
    }
    %c0 = arith.constant 0 : index
    %c0_1 = arith.constant 0 : index
    %3 = vector.load %arg1[%c0, %c0_1] : memref<16x128xf32, #tpu.memory_space<vmem>>, vector<16x128xf32>
    %c0_2 = arith.constant 0 : index
    %c0_3 = arith.constant 0 : index
    %4 = vector.load %arg2[%c0_2, %c0_3] : memref<16x128xf32, #tpu.memory_space<vmem>>, vector<16x128xf32>
    %5 = vector.extract_strided_slice %3 {offsets = [0, 1], sizes = [16, 127], strides = [1, 1]} : vector<16x128xf32> to vector<16x127xf32>
    %6 = vector.extract_strided_slice %3 {offsets = [0, 0], sizes = [16, 127], strides = [1, 1]} : vector<16x128xf32> to vector<16x127xf32>
    %7 = arith.subf %5, %6 : vector<16x127xf32>
    %8 = vector.extract_strided_slice %4 {offsets = [0, 1], sizes = [16, 127], strides = [1, 1]} : vector<16x128xf32> to vector<16x127xf32>
    %9 = vector.extract_strided_slice %4 {offsets = [0, 0], sizes = [16, 127], strides = [1, 1]} : vector<16x128xf32> to vector<16x127xf32>
    %10 = arith.subf %8, %9 : vector<16x127xf32>
    %11 = arith.mulf %7, %10 : vector<16x127xf32>
    %cst = arith.constant 0.000000e+00 : f32
    %12 = vector.broadcast %cst : f32 to vector<16x127xf32>
    %13 = arith.cmpf ogt, %11, %12 : vector<16x127xf32>
    %c0_4 = arith.constant 0 : index
    %c0_5 = arith.constant 0 : index
    %14 = vector.load %arg4[%c0_4, %c0_5] : memref<16x127xf32, #tpu.memory_space<vmem>>, vector<16x127xf32>
    %15 = arith.extui %13 : vector<16x127xi1> to vector<16x127xi32>
    %16 = arith.sitofp %15 : vector<16x127xi32> to vector<16x127xf32>
    %17 = arith.addf %14, %16 : vector<16x127xf32>
    %c0_6 = arith.constant 0 : index
    %c0_7 = arith.constant 0 : index
    %18 = vector.load %arg4[%c0_6, %c0_7] : memref<16x127xf32, #tpu.memory_space<vmem>>, vector<16x127xf32>
    tpu.vector_store %arg4[%c0_6, %c0_7], %17 {strides = array<i32>} : memref<16x127xf32, #tpu.memory_space<vmem>>, vector<16x127xf32>,
    %c0_i32_8 = arith.constant 0 : i32
    %19 = arith.cmpi eq, %arg0, %c0_i32_8 : i32
    %20 = arith.extui %19 : i1 to i32
    %c0_i32_9 = arith.constant 0 : i32
    %21 = arith.cmpi ne, %20, %c0_i32_9 : i32
    scf.if %21 {
      %c0_10 = arith.constant 0 : index
      %c0_11 = arith.constant 0 : index
      %22 = vector.load %arg4[%c0_10, %c0_11] : memref<16x127xf32, #tpu.memory_space<vmem>>, vector<16x127xf32>
      %23 = vector.shape_cast %22 : vector<16x127xf32> to vector<1x16x127xf32>
      %cst_12 = arith.constant dense<0.000000e+00> : vector<1xf32>
      %24 = vector.multi_reduction <add>, %23, %cst_12 [1, 2] : vector<1x16x127xf32> to vector<1xf32>
      %25 = vector.shape_cast %24 : vector<1xf32> to vector<1x1x1xf32>
      %26 = vector.extract %25[0, 0, 0] : f32 from vector<1x1x1xf32>
      %cst_13 = arith.constant 4.921260e-04 : f32
      %27 = arith.mulf %26, %cst_13 : f32
      %c0_14 = arith.constant 0 : index
      %c0_15 = arith.constant 0 : index
      %28 = memref.load %arg3[%c0_14, %c0_15] : memref<1x1xf32, #tpu.memory_space<smem>>
      memref.store %27, %arg3[%c0_14, %c0_15] : memref<1x1xf32, #tpu.memory_space<smem>>
    } else {
    }
    return
  }
  func.func @transform_0(%arg0: i32) -> (i32, i32) {
    %c0_i32 = arith.constant 0 : i32
    %c0_i32_0 = arith.constant 0 : i32
    return %arg0, %c0_i32 : i32, i32
  }
  func.func @transform_1(%arg0: i32) -> (i32, i32) {
    %c0_i32 = arith.constant 0 : i32
    %c0_i32_0 = arith.constant 0 : i32
    return %arg0, %c0_i32 : i32, i32
  }
  func.func @transform_2(%arg0: i32) -> (i32, i32) {
    %c0_i32 = arith.constant 0 : i32
    %c0_i32_0 = arith.constant 0 : i32
    %c0_i32_1 = arith.constant 0 : i32
    return %c0_i32, %c0_i32_0 : i32, i32
  }
}

</mosaic_0001>

<llo_original>
// kernel: tpu_custom_call.1
$region0: #{tpu_custom_call.1}
  #allocation0 [shape = 'u32[]', space=smem, size = 0x4, offset = 0x4, fixed_abs, tag = 'smem constant byte address 0x4 - core index']
  #allocation1 [shape = 'u32[144,128]{1,0:T(1,128)}', space=vmem, size = 0x12000, scoped, tag = 'internal scratch']
  #allocation2 [shape = 'f32[16,127]{1,0:T(8,128)}', space=vmem, size = 0x2000, scoped, tag = 'scratch operand']
  %s0 = inlined_call_operand.hbm [shape: f32[16,128], index: 0, kind: input, shape index: {}]
  %s1 = inlined_call_operand.hbm [shape: f32[16,128], index: 1, kind: input, shape index: {}]
  %s2 = inlined_call_operand.hbm [shape: f32[1,1], index: 2, kind: output, shape index: {}]
  %s3 = sld [smem:[#allocation0]]
  $region34: #{tpu_custom_call.1} parent=0
    _
  %s5 = ssub.s32 1, %s3
  %s6 = scalar_select 0, %s5, %s3
  $region1: #{tpu_custom_call.1} parent=0
    #allocation3 [shape = 'u8[8192]{0}', space=vmem, size = 0x2000, scoped, tag = 'input window, operand 0, single buffered']
    #allocation4 [shape = 's32[1]{0}', space=sflag, size = 0x4, scoped, tag = 'scoped memory for tpu_custom_call.1']
    #allocation5 [shape = 's32[1]{0}', space=sflag, size = 0x4, scoped, tag = 'scoped memory for tpu_custom_call.1']
    #allocation6 [shape = 'u8[8192]{0}', space=vmem, size = 0x2000, scoped, tag = 'input window, operand 1, single buffered']
    #allocation7 [shape = 's32[1]{0}', space=sflag, size = 0x4, scoped, tag = 'scoped memory for tpu_custom_call.1']
    #allocation8 [shape = 'u8[512]{0}', space=smem, size = 0x200, scoped, tag = 'output window, operand 0, single buffered']
    %7 = vsyncpa [#allocation4], 0
    %8 = vsyncpa [#allocation7], 0
    %9 = vsyncpa [#allocation5], 0
    // Predicated region
    $region2: #{tpu_custom_call.1} parent=1 // pred_check
      _
    $region3: #{tpu_custom_call.1} parent=1 // pred_check_branch
      %11 = sbr.rel (0) target = $region5
    $region4: #{tpu_custom_call.1} parent=1 // pred_region
      %s13 = ssub.s32 256, 256
      %14 = vsyncadd [#allocation4], %s13
      %s15 = sshll.u32 [#allocation3], 4
      %s16 = int_to_ptr.vmem [resolvable:$true] %s15
      %21 = dma.hbm_to_vmem [thread:$0]  %s0, 256, %s16, [#allocation4], 128, 128, 8
    $region5: #{tpu_custom_call.1} parent=1 // pred_fallthru
      _
    // Predicated region
    $region6: #{tpu_custom_call.1} parent=1 // pred_check
      _
    $region7: #{tpu_custom_call.1} parent=1 // pred_check_branch
      %23 = sbr.rel (0) target = $region9
    $region8: #{tpu_custom_call.1} parent=1 // pred_region
      %s25 = ssub.s32 256, 256
      %26 = vsyncadd [#allocation7], %s25
      %s27 = sshll.u32 [#allocation6], 4
      %s28 = int_to_ptr.vmem [resolvable:$true] %s27
      %33 = dma.hbm_to_vmem [thread:$0]  %s1, 256, %s28, [#allocation7], 128, 128, 8
    $region9: #{tpu_custom_call.1} parent=1 // pred_fallthru
      _
    // Predicated region
    $region10: #{tpu_custom_call.1} parent=1 // pred_check
      _
    $region11: #{tpu_custom_call.1} parent=1 // pred_check_branch
      %35 = sbr.rel (0) target = $region13
    $region12: #{tpu_custom_call.1} parent=1 // pred_region
      %36 = dma.done [#allocation4], 256
    $region13: #{tpu_custom_call.1} parent=1 // pred_fallthru
      _
    // Predicated region
    $region14: #{tpu_custom_call.1} parent=1 // pred_check
      _
    $region15: #{tpu_custom_call.1} parent=1 // pred_check_branch
      %38 = sbr.rel (0) target = $region17
    $region16: #{tpu_custom_call.1} parent=1 // pred_region
      %39 = dma.done [#allocation7], 256
    $region17: #{tpu_custom_call.1} parent=1 // pred_fallthru
      _
    %p40 = scmp.eq.s32.totalorder 0, 0
    // Predicated region
    $region18: #{tpu_custom_call.1} parent=1 // pred_check
      %p41 = pneg %p40
    $region19: #{tpu_custom_call.1} parent=1 // pred_check_branch
      %43 = sbr.rel (%p41) target = $region21
    $region20: #{tpu_custom_call.1} parent=1 // pred_region
      %vm44 = vcmask 1039360
      %45 = vst.msk [vmem:[#allocation2] sm:$0xff] %vm44, 0.0
      %46 = vst.msk [vmem:[#allocation2 + $0x8] sm:$0xff] %vm44, 0.0
    $region21: #{tpu_custom_call.1} parent=1 // pred_fallthru
      _
    %v47 = vld [vmem:[#allocation3] sm:$0xff]
    %v48 = vld [vmem:[#allocation3 + $0x8] sm:$0xff]
    %v49 = vld [vmem:[#allocation6] sm:$0xff]
    %v50 = vld [vmem:[#allocation6 + $0x8] sm:$0xff]
    %53 = vrot.lane.b32.xlu0 %v47, 1
    %v54 = vpop.permute.xlu0 %53
    %55 = vrot.lane.b32.xlu0 %v48, 1
    %v56 = vpop.permute.xlu0 %55
    %v59 = vsub.f32 %v47, %v54
    %v60 = vsub.f32 %v48, %v56
    %63 = vrot.lane.b32.xlu0 %v49, 1
    %v64 = vpop.permute.xlu0 %63
    %65 = vrot.lane.b32.xlu0 %v50, 1
    %v66 = vpop.permute.xlu0 %65
    %v69 = vsub.f32 %v49, %v64
    %v70 = vsub.f32 %v50, %v66
    %v71 = vmul.f32 %v59, %v69
    %v72 = vmul.f32 %v60, %v70
    %vm73 = vcmp.gt.f32.partialorder %v71, 0.0
    %vm74 = vcmp.gt.f32.partialorder %v72, 0.0
    %v75 = vld [vmem:[#allocation2] sm:$0xff]
    %v76 = vld [vmem:[#allocation2 + $0x8] sm:$0xff]
    %v77 = vsel %vm73, 1, 0
    %v78 = vsel %vm74, 1, 0
    %v79 = vcvt.s32.f32 %v77
    %v80 = vcvt.s32.f32 %v78
    %83 = vrot.lane.b32.xlu0 %v79, 127
    %v84 = vpop.permute.xlu0 %83
    %85 = vrot.lane.b32.xlu0 %v80, 127
    %v86 = vpop.permute.xlu0 %85
    %v89 = vadd.f32 %v75, %v84
    %v90 = vadd.f32 %v76, %v86
    %vm91 = vcmask 1039360
    %92 = vst.msk [vmem:[#allocation2] sm:$0xff] %vm91, %v89
    %93 = vst.msk [vmem:[#allocation2 + $0x8] sm:$0xff] %vm91, %v90
    // Predicated region
    $region22: #{tpu_custom_call.1} parent=1 // pred_check
      %p94 = pneg %p40
    $region23: #{tpu_custom_call.1} parent=1 // pred_check_branch
      %96 = sbr.rel (%p94) target = $region25
    $region24: #{tpu_custom_call.1} parent=1 // pred_region
      %v97 = vld [vmem:[#allocation2] sm:$0xff]
      %v98 = vld [vmem:[#allocation2 + $0x8] sm:$0xff]
      %v99 = vsel %vm91, %v97, 0.0
      %v100 = vsel %vm91, %v98, 0.0
      %v101 = vadd.f32 %v99, %v100
      %102 = vadd.xlane.f32.xlu0 %v101
      %v103 = vpop.xlane.xlu0 %102
      %v104 = vrot.slane %v103, 4
      %v105 = vadd.f32 %v103, %v104
      %v106 = vrot.slane %v105, 2
      %v107 = vadd.f32 %v105, %v106
      %v108 = vrot.slane %v107, 1
      %v109 = vadd.f32 %v107, %v108
      %s110 = vtos %v109
      %s111 = smul.f32 %s110, 0.000492126
      %s112 = scalar_lea.smem [#allocation8], 0
      %113 = sst [smem:[%s112]] %s111
    $region25: #{tpu_custom_call.1} parent=1 // pred_fallthru
      _
    // Predicated region
    $region26: #{tpu_custom_call.1} parent=1 // pred_check
      _
    $region27: #{tpu_custom_call.1} parent=1 // pred_check_branch
      %115 = sbr.rel (0) target = $region29
    $region28: #{tpu_custom_call.1} parent=1 // pred_region
      %s117 = ssub.s32 16, 16
      %118 = vsyncadd [#allocation5], %s117
      %121 = dma.smem_to_hbm [#allocation8], 16, %s2, [#allocation5]
    $region29: #{tpu_custom_call.1} parent=1 // pred_fallthru
      _
    // Predicated region
    $region30: #{tpu_custom_call.1} parent=1 // pred_check
      _
    $region31: #{tpu_custom_call.1} parent=1 // pred_check_branch
      %123 = sbr.rel (0) target = $region33
    $region32: #{tpu_custom_call.1} parent=1 // pred_region
      %124 = dma.done [#allocation5], 16
    $region33: #{tpu_custom_call.1} parent=1 // pred_fallthru
      _
    %125 = sfence
    %126 = vsyncpa [#allocation4], 1
    %127 = vsyncpa [#allocation7], 1
    %128 = vsyncpa [#allocation5], 1

</llo_original>
